<compile_context>
chip_gen: v7x
topology: tpu7x:2x2x1
jax: 0.10.0
libtpu: 0.0.40
codegen_flags: <defaults>
</compile_context>

<pallas_src>
import functools
import math

import jax
import jax.numpy as jnp
from jax import lax
from jax.experimental import pallas as pl
from jax.experimental.pallas import tpu as pltpu


# ----------------------------------------------------------------------------
# Tiling helpers
# ----------------------------------------------------------------------------
_VMEM_TILE_BUDGET = 12 * 1024 * 1024  # double-buffered working-set target


def _round_down_mult(x, m):
    return (x // m) * m


def _num_tensorcores():
    """Best-effort TensorCore count; conservative default is 2 (v7x).  On
    1-TC chips (v5e/v6e) the extra grid steps this forces cost only ~0.35us
    each, negligible once tiles are large."""
    try:
        info = pltpu.get_tpu_info()
        for attr in ("num_cores", "core_count", "num_tensorcores",
                     "tensorcore_count"):
            v = getattr(info, attr, None)
            if isinstance(v, int) and v > 0:
                return v
    except Exception:
        pass
    return 2


def _choose_token_tile(n, c, o, *, in_itemsize, out_itemsize, batch,
                       target=8192):
    """Token tile (tokens on the lane axis of x, sublane axis of the output).
    Multiple of 128 (or all of N if N < 128), sized by:
      (a) ~12 MiB double-buffered VMEM footprint (safe on v5e default scoped),
      (b) the `target` (amortizes per-step pipeline overhead),
      (c) grid coverage: >= 2 steps per TensorCore when there is enough work.
    """
    if n < 128:
        return n
    per_token = 2 * (c * in_itemsize + o * out_itemsize)        # dbl-buffered
    fixed = 2 * (c * o * in_itemsize + o * 4)                    # weight+bias
    vmem_cap = max(
        128,
        _round_down_mult(max(128, (_VMEM_TILE_BUDGET - fixed) // per_token),
                         128))
    tn = min(target, vmem_cap, max(128, _round_down_mult(n, 128)))
    min_steps = 2 * _num_tensorcores()
    steps_per_batch = -(-min_steps // batch)                     # ceil div
    if steps_per_batch > 1:
        cov = max(128, _round_down_mult(n // steps_per_batch, 128))
        tn = min(tn, cov)
    return int(tn)


# ----------------------------------------------------------------------------
# Pallas kernel: channels-first linear projection (one head, one token tile)
# ----------------------------------------------------------------------------
def _linear_cfirst_kernel(x_ref, w_ref, b_ref, o_ref):
    # x_ref: (C, TN)   w_ref: (C, O)   b_ref: (1, O)   o_ref: (TN, O)
    # Contract C (lhs dim 0) directly -- x never needs an eager transpose.
    acc = lax.dot_general(
        x_ref[...], w_ref[...],
        dimension_numbers=(((0,), (0,)), ((), ())),
        preferred_element_type=jnp.float32,
    )
    o_ref[...] = (acc + b_ref[...]).astype(o_ref.dtype)


def _project_channels_first(x_bcn, w, b, tn):
    """x_bcn: (B, C, N) native layout; w: (C, O); b: (1, O) -> (B, N, O)."""
    B, C, N = x_bcn.shape
    O = w.shape[1]
    grid = (B, pl.cdiv(N, tn))
    return pl.pallas_call(
        _linear_cfirst_kernel,
        out_shape=jax.ShapeDtypeStruct((B, N, O), x_bcn.dtype),
        grid_spec=pltpu.PrefetchScalarGridSpec(
            num_scalar_prefetch=0,
            grid=grid,
            in_specs=[
                pl.BlockSpec((None, C, tn), lambda bi, j: (bi, 0, j)),
                pl.BlockSpec((C, O), lambda bi, j: (0, 0)),   # full weight
                pl.BlockSpec((1, O), lambda bi, j: (0, 0)),   # full bias
            ],
            # Unpadded O-wide output block: covers the full last dim, so each
            # write-back is a contiguous HBM region; masked vst cost hides
            # under DMA.
            out_specs=pl.BlockSpec((None, tn, O), lambda bi, j: (bi, j, 0)),
        ),
        compiler_params=pltpu.CompilerParams(
            dimension_semantics=("parallel", "parallel")),
    )(x_bcn, w, b)


# ----------------------------------------------------------------------------
# Whole-head jitted forwards (reshape + kernel [+ row gather] in one jit)
# ----------------------------------------------------------------------------
@functools.partial(jax.jit, static_argnames=("tn",))
def _forward_all(x, w, b, *, tn):
    B, C = x.shape[0], x.shape[1]
    N = math.prod(x.shape[2:])
    x_bcn = x.reshape(B, C, N)        # free reshape: stays channels-first
    w = w.astype(x.dtype)             # tiny; lets bf16 activations stream
    return _project_channels_first(x_bcn, w, b, tn)


@functools.partial(jax.jit, static_argnames=("tn", "m_sel"))
def _forward_masked(x, mask, w, b, *, tn, m_sel):
    # Project ALL tokens with the streaming kernel, then gather the selected
    # rows of y (contiguous O-wide rows).  Avoids the strided per-token gather
    # over channels-first x.
    y = _forward_all(x, w, b, tn=tn)                      # (B, N, O)
    B, N, O = y.shape
    idx = jnp.nonzero(mask.reshape(-1), size=m_sel, fill_value=0)[0]
    return y.reshape(B * N, O)[idx]


# ----------------------------------------------------------------------------
# MSSeparateHead in JAX (parameters + forward), matmuls done in Pallas.
# ----------------------------------------------------------------------------
class MSSeparateHeadPallas:
    def __init__(self, head_dim_list, cfg, num_classes, *, key):
        del cfg  # unused, kept for parity with the PyTorch module
        self.params = []
        for head_dim, num_class in zip(head_dim_list, num_classes):
            key, wkey = jax.random.split(key)
            # trunc_normal_(std=0.02); bias = 0
            w_t = (
                jax.random.truncated_normal(
                    wkey, -2.0, 2.0, (num_class, head_dim), dtype=jnp.float32
                )
                * 0.02
            )
            w = w_t.T                                      # (C, num_class)
            b = jnp.zeros((1, num_class), dtype=jnp.float32)
            self.params.append((w, b))

    def __call__(self, block_outputs, output_masks, return_all):
        model_outputs = []
        for idx, x in enumerate(block_outputs):
            B, C = x.shape[0], x.shape[1]
            N = math.prod(x.shape[2:])
            w, b = self.params[idx]
            O = w.shape[1]
            tn = _choose_token_tile(
                N, C, O,
                in_itemsize=x.dtype.itemsize,
                out_itemsize=x.dtype.itemsize,
                batch=B)
            if return_all:
                model_outputs.append(_forward_all(x, w, b, tn=tn))
            else:
                # Dynamic-shape boolean selection (x[mask]): the output row
                # count is data-dependent, so we read the True-count once per
                # head (tiny host sync) and use a fixed-size nonzero so the
                # rest of the path stays jitted and on-device.
                # TODO(synk): accept a static selection capacity from the
                # caller (fixed mask ratio) to remove this sync, and/or move
                # the row gather in-kernel via scalar-prefetched indices.
                mask = output_masks[idx]
                m_sel = int(jnp.sum(mask))
                if m_sel == 0:
                    model_outputs.append(jnp.zeros((0, O), x.dtype))
                    continue
                model_outputs.append(
                    _forward_masked(x, mask, w, b, tn=tn, m_sel=m_sel))
        return model_outputs


# ----------------------------------------------------------------------------
# Reference (pure jnp, high-precision matmul) for verification.
# ----------------------------------------------------------------------------
def _reference_forward(head, block_outputs, output_masks, return_all):
    outs = []
    for idx, x in enumerate(block_outputs):
        B, C = x.shape[0], x.shape[1]
        N = math.prod(x.shape[2:])
        xt = jnp.transpose(x.reshape(B, C, N), (0, 2, 1)).astype(jnp.float32)
        if not return_all:
            xt = xt[output_masks[idx]]
        w, b = head.params[idx]
        y = jnp.matmul(xt, w, precision=lax.Precision.HIGHEST) + b
        outs.append(y)
    return outs


if __name__ == "__main__":
    key = jax.random.PRNGKey(0)

    # Two heads (multi-scale): input dims / prediction-target dims per head.
    head_dim_list = [32, 64]
    num_classes = [48, 96]

    head = MSSeparateHeadPallas(head_dim_list, cfg=None,
                                num_classes=num_classes, key=key)

    # Small deterministic inputs: (B, C, T, H, W)
    k1, k2 = jax.random.split(jax.random.PRNGKey(0))
    x0 = jax.random.normal(k1, (2, 32, 4, 8, 8), dtype=jnp.float32)    # N = 256
    x1 = jax.random.normal(k2, (2, 64, 2, 10, 10), dtype=jnp.float32)  # N = 200 (edge tiles)
    block_outputs = [x0, x1]

    # Boolean output masks, shape (B, N), deterministic pattern.
    m0 = (jnp.arange(2 * 256).reshape(2, 256) % 3) == 0
    m1 = (jnp.arange(2 * 200).reshape(2, 200) % 2) == 0
    output_masks = [m0, m1]

    # --- return_all = True (project all tokens, channels-first kernel) ---
    outs_all = head(block_outputs, output_masks, return_all=True)
    outs_all = [jax.block_until_ready(o) for o in outs_all]
    ref_all = _reference_forward(head, block_outputs, output_masks, True)
    for o, r in zip(outs_all, ref_all):
        assert o.shape == r.shape, (o.shape, r.shape)
        assert jnp.allclose(o, r, atol=3e-3, rtol=3e-3)

    # --- return_all = False (project, then gather masked rows of y) ---
    outs_sel = head(block_outputs, output_masks, return_all=False)
    outs_sel = [jax.block_until_ready(o) for o in outs_sel]
    ref_sel = _reference_forward(head, block_outputs, output_masks, False)
    for o, r in zip(outs_sel, ref_sel):
        assert o.shape == r.shape, (o.shape, r.shape)
        assert jnp.allclose(o, r, atol=3e-3, rtol=3e-3)

    # --- bf16 activation path (halves HBM streams; f32 accumulation) ---
    outs_bf16 = head([x0.astype(jnp.bfloat16)], [m0], return_all=True)
    outs_bf16 = [jax.block_until_ready(o) for o in outs_bf16]
    assert outs_bf16[0].shape == ref_all[0].shape
    assert outs_bf16[0].dtype == jnp.bfloat16
    assert jnp.allclose(outs_bf16[0].astype(jnp.float32), ref_all[0],
                        atol=3e-2, rtol=0)

    print("KERNEL_OK")
</pallas_src>

<mosaic_0001>
module attributes {stable_mosaic.version = 11 : i64} {
  func.func @_linear_cfirst_kernel(%arg0: i32, %arg1: i32, %arg2: memref<1x32x128xf32, #tpu.memory_space<vmem>>, %arg3: memref<32x48xf32, #tpu.memory_space<vmem>>, %arg4: memref<1x48xf32, #tpu.memory_space<vmem>>, %arg5: memref<1x128x48xf32, #tpu.memory_space<vmem>>) attributes {dimension_semantics = [#tpu.dimension_semantics<parallel>, #tpu.dimension_semantics<parallel>], iteration_bounds = array<i64: 2, 2>, scalar_prefetch = 0 : i64, scratch_operands = 0 : i64, tpu.core_type = #tpu.core_type<tc>, window_params = [{transform_indices = @transform_0, window_bounds = array<i64: 1, 32, 128>}, {pipeline_mode = #tpu.pipeline_mode<synchronous>, transform_indices = @transform_1, window_bounds = array<i64: 32, 48>}, {pipeline_mode = #tpu.pipeline_mode<synchronous>, transform_indices = @transform_2, window_bounds = array<i64: 1, 48>}, {transform_indices = @transform_3, window_bounds = array<i64: 1, 128, 48>}]} {
    %c0 = arith.constant 0 : index
    %c0_0 = arith.constant 0 : index
    %c0_1 = arith.constant 0 : index
    %0 = vector.load %arg2[%c0, %c0_0, %c0_1] : memref<1x32x128xf32, #tpu.memory_space<vmem>>, vector<1x32x128xf32>
    %1 = vector.shape_cast %0 : vector<1x32x128xf32> to vector<32x128xf32>
    %c0_2 = arith.constant 0 : index
    %c0_3 = arith.constant 0 : index
    %2 = vector.load %arg3[%c0_2, %c0_3] : memref<32x48xf32, #tpu.memory_space<vmem>>, vector<32x48xf32>
    %cst = arith.constant dense<0.000000e+00> : vector<128x48xf32>
    %3 = tpu.matmul %1, %2, %cst {dimension_numbers = #tpu.dot_dimension_numbers<[0], [0], [1], [1], [0, 1, 1, 1], [], []>} : vector<32x128xf32>, vector<32x48xf32>, vector<128x48xf32> -> vector<128x48xf32>
    %c0_4 = arith.constant 0 : index
    %c0_5 = arith.constant 0 : index
    %4 = vector.load %arg4[%c0_4, %c0_5] : memref<1x48xf32, #tpu.memory_space<vmem>>, vector<1x48xf32>
    %5 = vector.broadcast %4 : vector<1x48xf32> to vector<128x48xf32>
    %6 = arith.addf %3, %5 : vector<128x48xf32>
    %c0_6 = arith.constant 0 : index
    %c0_7 = arith.constant 0 : index
    %c0_8 = arith.constant 0 : index
    %7 = vector.load %arg5[%c0_6, %c0_7, %c0_8] : memref<1x128x48xf32, #tpu.memory_space<vmem>>, vector<1x128x48xf32>
    %8 = vector.shape_cast %7 : vector<1x128x48xf32> to vector<128x48xf32>
    %9 = vector.shape_cast %6 : vector<128x48xf32> to vector<1x128x48xf32>
    tpu.vector_store %arg5[%c0_6, %c0_7, %c0_8], %9 {strides = array<i32>} : memref<1x128x48xf32, #tpu.memory_space<vmem>>, vector<1x128x48xf32>,
    return
  }
  func.func @transform_0(%arg0: i32, %arg1: i32) -> (i32, i32, i32) {
    %c0_i32 = arith.constant 0 : i32
    %c0_i32_0 = arith.constant 0 : i32
    return %arg0, %c0_i32, %arg1 : i32, i32, i32
  }
  func.func @transform_1(%arg0: i32, %arg1: i32) -> (i32, i32) {
    %c0_i32 = arith.constant 0 : i32
    %c0_i32_0 = arith.constant 0 : i32
    %c0_i32_1 = arith.constant 0 : i32
    return %c0_i32, %c0_i32_0 : i32, i32
  }
  func.func @transform_2(%arg0: i32, %arg1: i32) -> (i32, i32) {
    %c0_i32 = arith.constant 0 : i32
    %c0_i32_0 = arith.constant 0 : i32
    %c0_i32_1 = arith.constant 0 : i32
    return %c0_i32, %c0_i32_0 : i32, i32
  }
  func.func @transform_3(%arg0: i32, %arg1: i32) -> (i32, i32, i32) {
    %c0_i32 = arith.constant 0 : i32
    %c0_i32_0 = arith.constant 0 : i32
    return %arg0, %arg1, %c0_i32 : i32, i32, i32
  }
}

</mosaic_0001>

<llo_original>
// kernel: _forward_all.1
$region0: #{_forward_all.1}
  #allocation0 [shape = 'u32[]', space=smem, size = 0x4, offset = 0x4, fixed_abs, tag = 'smem constant byte address 0x4 - core index']
  #allocation1 [shape = 'u32[144,128]{1,0:T(1,128)}', space=vmem, size = 0x12000, scoped, tag = 'internal scratch']
  %s0 = inlined_call_operand.vmem [shape: f32[2,32,256], index: 0, kind: input, shape index: {}]
  %s1 = inlined_call_operand.vmem [shape: f32[32,48], index: 1, kind: input, shape index: {}]
  %s2 = inlined_call_operand.vmem [shape: f32[1,48], index: 2, kind: input, shape index: {}]
  %s3 = inlined_call_operand.vmem [shape: f32[2,256,48], index: 3, kind: output, shape index: {}]
  %s4 = sld [smem:[#allocation0]]
  $region83: #{_forward_all.1} parent=0
    _
  %s6 = ssub.s32 1, %s4
  %s7 = scalar_select 0, %s6, %s4
  $region1: #{_forward_all.1} parent=0
    #allocation2 [shape = 'u8[32768]{0}', space=vmem, size = 0x8000, scoped, tag = 'input window, operand 0']
    loop: start=0, step=1, limit=6
    $region2: #{_forward_all.1} parent=1 // loop_pre_header
      _
    $region3: #{_forward_all.1} parent=1 // loop_header
      %s9 = sphi 0, %s13
      %p10 = scmp.ge.s32.totalorder %s9, 6
      %s16 = sphi 0, %s28
      %s17 = sphi 0, %s24
      %s18 = sphi 0, %s16
      %s19 = sphi 0, %s17
      %s20 = sphi 0, %s18
      %s21 = sphi 0, %s19
      %s33 = sphi 0, %s35
      %s36 = sphi 0, %s33
      %s37 = sphi 0, %s36
      %s53 = sphi 0, %s37
      %s57 = sphi 0, %s57
      %s59 = sphi 0, %s57
      %s60 = sphi 0, %s59
      %s74 = sphi 0, %s60
      %s78 = sphi 0, %s78
      %s80 = sphi 0, %s78
      %s81 = sphi 0, %s80
      %s95 = sphi 0, %s81
      %s103 = sphi 0, %s105
      %s106 = sphi 0, %s103
      %s107 = sphi 0, %s106
      %s123 = sphi 0, %s107
    $region4: #{_forward_all.1} parent=1 // loop_header_branch
      %12 = sbr.rel (%p10) target = $region8
    $region5: #{_forward_all.1} parent=1 // loop_body
      %s14 = ssub.s32 %s9, 1
      %s15 = ssub.s32 %s9, 2
      %s22 = sadd.s32 1, %s17
      %p23 = scmp.ge.s32.totalorder %s22, 2
      %s24 = scalar_select %p23, 0, %s22
      %s25 = sadd.s32 1, %s16
      %s26 = scalar_select %p23, %s25, %s16
      %p27 = scmp.ge.s32.totalorder %s26, 2
      %s28 = scalar_select %p27, 0, %s26
      %s29 = ssub.s32 %s16, %s28
      %s30 = ssub.s32 %s17, %s24
      %s31 = sor.u32 %s29, %s30
      %p32 = scmp.eq.s32.totalorder %s31, 0
      %s34 = sadd.s32 %s33, 1
      %s35 = scalar_select %p32, %s33, %s34
      %p38 = pneg %p32
      %p39 = scmp.eq.s32.totalorder %s9, 3
      %p40 = por %p38, %p39
      %p41 = scmp.ne.s32.totalorder %s33, %s36
      %p42 = scmp.eq.s32.totalorder %s9, 0
      %p43 = por %p41, %p42
      %p44 = scmp.ne.s32.totalorder %s33, %s36
      %p45 = scmp.eq.s32.totalorder %s14, 3
      %p46 = por %p44, %p45
      %p47 = scmp.ne.s32.totalorder %s36, %s37
      %p48 = scmp.eq.s32.totalorder %s14, 0
      %p49 = por %p47, %p48
      %p50 = scmp.ne.s32.totalorder %s36, %s37
      %p51 = scmp.eq.s32.totalorder %s15, 3
      %p52 = por %p50, %p51
      %p54 = scmp.ne.s32.totalorder %s37, %s53
      %p55 = scmp.eq.s32.totalorder %s15, 0
      %p56 = por %p54, %p55
      %s58 = sadd.s32 %s57, 1
      %p61 = scmp.eq.s32.totalorder %s9, 3
      %p62 = scmp.ne.s32.totalorder %s57, %s59
      %p63 = scmp.eq.s32.totalorder %s9, 0
      %p64 = por %p62, %p63
      %p65 = scmp.ne.s32.totalorder %s57, %s59
      %p66 = scmp.eq.s32.totalorder %s14, 3
      %p67 = por %p65, %p66
      %p68 = scmp.ne.s32.totalorder %s59, %s60
      %p69 = scmp.eq.s32.totalorder %s14, 0
      %p70 = por %p68, %p69
      %p71 = scmp.ne.s32.totalorder %s59, %s60
      %p72 = scmp.eq.s32.totalorder %s15, 3
      %p73 = por %p71, %p72
      %p75 = scmp.ne.s32.totalorder %s60, %s74
      %p76 = scmp.eq.s32.totalorder %s15, 0
      %p77 = por %p75, %p76
      %s79 = sadd.s32 %s78, 1
      %p82 = scmp.eq.s32.totalorder %s9, 3
      %p83 = scmp.ne.s32.totalorder %s78, %s80
      %p84 = scmp.eq.s32.totalorder %s9, 0
      %p85 = por %p83, %p84
      %p86 = scmp.ne.s32.totalorder %s78, %s80
      %p87 = scmp.eq.s32.totalorder %s14, 3
      %p88 = por %p86, %p87
      %p89 = scmp.ne.s32.totalorder %s80, %s81
      %p90 = scmp.eq.s32.totalorder %s14, 0
      %p91 = por %p89, %p90
      %p92 = scmp.ne.s32.totalorder %s80, %s81
      %p93 = scmp.eq.s32.totalorder %s15, 3
      %p94 = por %p92, %p93
      %p96 = scmp.ne.s32.totalorder %s81, %s95
      %p97 = scmp.eq.s32.totalorder %s15, 0
      %p98 = por %p96, %p97
      %s99 = ssub.s32 %s16, %s28
      %s100 = ssub.s32 %s17, %s24
      %s101 = sor.u32 %s99, %s100
      %p102 = scmp.eq.s32.totalorder %s101, 0
      %s104 = sadd.s32 %s103, 1
      %s105 = scalar_select %p102, %s103, %s104
      %p108 = pneg %p102
      %p109 = scmp.eq.s32.totalorder %s9, 3
      %p110 = por %p108, %p109
      %p111 = scmp.ne.s32.totalorder %s103, %s106
      %p112 = scmp.eq.s32.totalorder %s9, 0
      %p113 = por %p111, %p112
      %p114 = scmp.ne.s32.totalorder %s103, %s106
      %p115 = scmp.eq.s32.totalorder %s14, 3
      %p116 = por %p114, %p115
      %p117 = scmp.ne.s32.totalorder %s106, %s107
      %p118 = scmp.eq.s32.totalorder %s14, 0
      %p119 = por %p117, %p118
      %p120 = scmp.ne.s32.totalorder %s106, %s107
      %p121 = scmp.eq.s32.totalorder %s15, 3
      %p122 = por %p120, %p121
      %p124 = scmp.ne.s32.totalorder %s107, %s123
      %p125 = scmp.eq.s32.totalorder %s15, 0
      %p126 = por %p124, %p125
      %p127 = scmp.le.s32.totalorder 1, %s9
      %p128 = scmp.lt.s32.totalorder %s9, 5
      %p129 = pnand %p127, %p128
      %p130 = pneg %p129
      // Predicated region
      $region9: #{_forward_all.1} parent=5 // pred_check
        _
      $region10: #{_forward_all.1} parent=5 // pred_check_branch
        %132 = sbr.rel (%p129) target = $region12
      $region11: #{_forward_all.1} parent=5 // pred_region
        %s133 = ssub.s32 %s9, 1
        // Predicated region
        $region13: #{_forward_all.1} parent=11 // pred_check
          %p134 = pneg %p70
        $region14: #{_forward_all.1} parent=11 // pred_check_branch
          %136 = sbr.rel (%p134) target = $region16
        $region15: #{_forward_all.1} parent=11 // pred_region
          _
        $region16: #{_forward_all.1} parent=11 // pred_fallthru
          _
        // Predicated region
        $region17: #{_forward_all.1} parent=11 // pred_check
          %p137 = pneg %p91
        $region18: #{_forward_all.1} parent=11 // pred_check_branch
          %139 = sbr.rel (%p137) target = $region20
        $region19: #{_forward_all.1} parent=11 // pred_region
          _
        $region20: #{_forward_all.1} parent=11 // pred_fallthru
          _
      $region12: #{_forward_all.1} parent=5 // pred_fallthru
        _
      %p140 = scmp.lt.s32.totalorder %s9, 4
      // Predicated region
      $region21: #{_forward_all.1} parent=5 // pred_check
        %p141 = pneg %p140
      $region22: #{_forward_all.1} parent=5 // pred_check_branch
        %143 = sbr.rel (%p141) target = $region24
      $region23: #{_forward_all.1} parent=5 // pred_region
        // Predicated region
        $region25: #{_forward_all.1} parent=23 // pred_check
          %p144 = pneg %p43
        $region26: #{_forward_all.1} parent=23 // pred_check_branch
          %146 = sbr.rel (%p144) target = $region28
        $region27: #{_forward_all.1} parent=23 // pred_region
          %s147 = sand.u32 %s33, 1
          %s148 = sand.u32 %s33, 1
          %s149 = smul.addr %s148, 32
          %s150 = scalar_lea.vmem [#allocation2], %s149
          %s151 = smul.addr %s16, 8
          %s152 = sadd.s32 %s17, %s151
          %s153 = smul.addr %s152, 8
          %s154 = scalar_lea.vmem %s0, %s153
          // Predicated region
          $region29: #{_forward_all.1} parent=27 // pred_check
            _
          $region30: #{_forward_all.1} parent=27 // pred_check_branch
            %156 = sbr.rel (0) target = $region32
          $region31: #{_forward_all.1} parent=27 // pred_region
            // Predicated region
            $region33: #{_forward_all.1} parent=31 // pred_check
              _
            $region34: #{_forward_all.1} parent=31 // pred_check_branch
              %158 = sbr.rel (0) target = $region36
            $region35: #{_forward_all.1} parent=31 // pred_region
              // Predicated region
              $region48: #{_forward_all.1} parent=35 // pred_check
                _
              $region49: #{_forward_all.1} parent=35 // pred_check_branch
                %179 = sbr.rel (0) target = $region51
              $region50: #{_forward_all.1} parent=35 // pred_region
                loop: start=0, step=1, limit=1
                $region52: #{_forward_all.1} parent=50 // loop_pre_header
                  _
                $region53: #{_forward_all.1} parent=50 // loop_header
                  %s181 = sphi 0, %s185
                  %p182 = scmp.ge.s32.totalorder %s181, 1
                  %s186 = sphi %s154, %s154
                  %s187 = sphi %s150, %s150
                $region54: #{_forward_all.1} parent=50 // loop_header_branch
                  %184 = sbr.rel (%p182) target = $region58
                $region55: #{_forward_all.1} parent=50 // loop_body
                  %v188 = vld [vmem:[%s186] sm:$0xff]
                  %189 = vst [vmem:[%s187] sm:$0xff] %v188
                  %v190 = vld [vmem:[%s186 + $0x10] sm:$0xff]
                  %191 = vst [vmem:[%s187 + $0x8] sm:$0xff] %v190
                  %v192 = vld [vmem:[%s186 + $0x20] sm:$0xff]
                  %193 = vst [vmem:[%s187 + $0x10] sm:$0xff] %v192
                  %v194 = vld [vmem:[%s186 + $0x30] sm:$0xff]
                  %195 = vst [vmem:[%s187 + $0x18] sm:$0xff] %v194
                $region56: #{_forward_all.1} parent=50 // loop_footer
                  %s185 = sadd.s32 1, %s181
                $region57: #{_forward_all.1} parent=50 // loop_footer_branch
                  %180 = sbr.rel target = $region53
                $region58: #{_forward_all.1} parent=50 // loop_exit
                  _
              $region51: #{_forward_all.1} parent=35 // pred_fallthru
                _
              // Predicated region
              $region59: #{_forward_all.1} parent=35 // pred_check
                _
              $region60: #{_forward_all.1} parent=35 // pred_check_branch
                %197 = sbr.rel target = $region62
              $region61: #{_forward_all.1} parent=35 // pred_region
                _
              $region62: #{_forward_all.1} parent=35 // pred_fallthru
                _
            $region36: #{_forward_all.1} parent=31 // pred_fallthru
              _
            // Predicated region
            $region37: #{_forward_all.1} parent=31 // pred_check
              _
            $region38: #{_forward_all.1} parent=31 // pred_check_branch
              %160 = sbr.rel target = $region40
            $region39: #{_forward_all.1} parent=31 // pred_region
              loop: start=0, step=1, limit=1
              $region41: #{_forward_all.1} parent=39 // loop_pre_header
                _
              $region42: #{_forward_all.1} parent=39 // loop_header
                %s163 = sphi 0, %s167
                %p164 = scmp.ge.s32.totalorder %s163, 1
                %s168 = sphi %s154, %s154
                %s169 = sphi %s150, %s150
              $region43: #{_forward_all.1} parent=39 // loop_header_branch
                %166 = sbr.rel (%p164) target = $region47
              $region44: #{_forward_all.1} parent=39 // loop_body
                %v170 = vld [vmem:[%s168] sm:$0xff]
                %171 = vst [vmem:[%s169] sm:$0xff] %v170
                %v172 = vld [vmem:[%s168 + $0x10] sm:$0xff]
                %173 = vst [vmem:[%s169 + $0x8] sm:$0xff] %v172
                %v174 = vld [vmem:[%s168 + $0x20] sm:$0xff]
                %175 = vst [vmem:[%s169 + $0x10] sm:$0xff] %v174
                %v176 = vld [vmem:[%s168 + $0x30] sm:$0xff]
                %177 = vst [vmem:[%s169 + $0x18] sm:$0xff] %v176
              $region45: #{_forward_all.1} parent=39 // loop_footer
                %s167 = sadd.s32 1, %s163
              $region46: #{_forward_all.1} parent=39 // loop_footer_branch
                %162 = sbr.rel target = $region42
              $region47: #{_forward_all.1} parent=39 // loop_exit
                _
            $region40: #{_forward_all.1} parent=31 // pred_fallthru
              _
          $region32: #{_forward_all.1} parent=27 // pred_fallthru
            _
          %198 = vnop
        $region28: #{_forward_all.1} parent=23 // pred_fallthru
          _
      $region24: #{_forward_all.1} parent=5 // pred_fallthru
        _
      %p199 = scmp.le.s32.totalorder 1, %s9
      %p200 = scmp.lt.s32.totalorder %s9, 5
      %p201 = pnand %p199, %p200
      %p202 = pneg %p201
      // Predicated region
      $region63: #{_forward_all.1} parent=5 // pred_check
        _
      $region64: #{_forward_all.1} parent=5 // pred_check_branch
        %204 = sbr.rel (%p201) target = $region66
      $region65: #{_forward_all.1} parent=5 // pred_region
        %s205 = ssub.s32 %s9, 1
        %s206 = sand.u32 %s36, 1
        %s207 = sand.u32 %s36, 1
        %s208 = smul.addr %s207, 32
        %s209 = scalar_lea.vmem [#allocation2], %s208
        // Predicated region
        $region67: #{_forward_all.1} parent=65 // pred_check
          %p210 = pneg %p49
        $region68: #{_forward_all.1} parent=65 // pred_check_branch
          %212 = sbr.rel (%p210) target = $region70
        $region69: #{_forward_all.1} parent=65 // pred_region
          _
        $region70: #{_forward_all.1} parent=65 // pred_fallthru
          _
        %s213 = sand.u32 %s36, 1
        %s214 = sand.u32 %s36, 1
        %s215 = smul.addr %s214, 32
        %s216 = scalar_lea.vmem [#allocation2], %s215
        %p217 = pneg %p49
        %p218 = pneg %p46
        %p219 = pneg %p70
        %p220 = pneg %p67
        %p221 = pneg %p91
        %p222 = pneg %p88
        %p223 = pneg %p119
        %p224 = pneg %p116
        %s225 = smul.u32 16, %s19
        %p226 = scmp.lt.s32.totalorder %s18, 1
        %s227 = scalar_select %p226, %s18, 1
        %p228 = scmp.lt.s32.totalorder %s225, 31
        %s229 = scalar_select %p228, %s225, 31
        %s230 = smul.addr %s227, 32
        %s231 = sadd.s32 %s229, %s230
        %s232 = smul.addr %s231, 8
        %s233 = scalar_lea.vmem %s3, %s232
        %s234 = smul.u32 16, %s19
        %p235 = scmp.lt.s32.totalorder %s18, 1
        %s236 = scalar_select %p235, %s18, 1
        %p237 = scmp.lt.s32.totalorder %s234, 31
        %s238 = scalar_select %p237, %s234, 31
        %s239 = smul.addr %s236, 32
        %s240 = sadd.s32 %s238, %s239
        %s241 = smul.addr %s240, 8
        %s242 = scalar_lea.vmem %s3, %s241
        %s243 = smul.u32 16, %s19
        %v244 = vld [vmem:[%s209] sm:$0xff]
        %v245 = vld [vmem:[%s209 + $0x8] sm:$0xff]
        %v246 = vld [vmem:[%s209 + $0x10] sm:$0xff]
        %v247 = vld [vmem:[%s209 + $0x18] sm:$0xff]
        %v248 = vld [vmem:[%s1] sm:$0xff]
        %v249 = vld [vmem:[%s1 + $0x8] sm:$0xff]
        %v250 = vld [vmem:[%s1 + $0x10] sm:$0xff]
        %v251 = vld [vmem:[%s1 + $0x18] sm:$0xff]
        %v252 = vld [vmem:[%s2] sm:$0x1]
        %v254 = vlaneseq
        %v255 = vshrl.u32 %v254, 7
        %v256 = vsub.s32 0, %v255
        %v257 = vrot.slane %v252, %v256
        %259 = vxpose.xlu0.b32.start [1/16] %v244, 128
        %260 = vxpose.xlu0.b32.cont [2/16] %v245, 128
        %261 = vxpose.xlu0.b32.cont [3/16] %v246, 128
        %262 = vxpose.xlu0.b32.cont [4/16] %v247, 128
        %263 = vxpose.xlu0.b32.cont [5/16] 0.0, 128
        %264 = vxpose.xlu0.b32.cont [6/16] 0.0, 128
        %265 = vxpose.xlu0.b32.cont [7/16] 0.0, 128
        %266 = vxpose.xlu0.b32.cont [8/16] 0.0, 128
        %267 = vxpose.xlu0.b32.cont [9/16] 0.0, 128
        %268 = vxpose.xlu0.b32.cont [10/16] 0.0, 128
        %269 = vxpose.xlu0.b32.cont [11/16] 0.0, 128
        %270 = vxpose.xlu0.b32.cont [12/16] 0.0, 128
        %271 = vxpose.xlu0.b32.cont [13/16] 0.0, 128
        %272 = vxpose.xlu0.b32.cont [14/16] 0.0, 128
        %273 = vxpose.xlu0.b32.cont [15/16] 0.0, 128
        %274 = vxpose.xlu0.b32.end [16/16] 0.0, 128
        %v275 = vpop.trf.xlu0
        %v276 = vpop.trf.xlu0
        %v277 = vpop.trf.xlu0
        %v278 = vpop.trf.xlu0
        %v279 = vpop.trf.xlu0
        %v280 = vpop.trf.xlu0
        %v281 = vpop.trf.xlu0
        %v282 = vpop.trf.xlu0
        %v283 = vpop.trf.xlu0
        %v284 = vpop.trf.xlu0
        %v285 = vpop.trf.xlu0
        %v286 = vpop.trf.xlu0
        %v287 = vpop.trf.xlu0
        %v288 = vpop.trf.xlu0
        %v289 = vpop.trf.xlu0
        %v290 = vpop.trf.xlu0
        %vm291 = vcmask 261120
        %v293 = vsel %vm291, %v275, 0
        %v296 = vsel %vm291, %v276, 0
        %v299 = vsel %vm291, %v277, 0
        %v302 = vsel %vm291, %v278, 0
        %v305 = vsel %vm291, %v279, 0
        %v308 = vsel %vm291, %v280, 0
        %v311 = vsel %vm291, %v281, 0
        %v314 = vsel %vm291, %v282, 0
        %v317 = vsel %vm291, %v283, 0
        %v320 = vsel %vm291, %v284, 0
        %v323 = vsel %vm291, %v285, 0
        %v326 = vsel %vm291, %v286, 0
        %v329 = vsel %vm291, %v287, 0
        %v332 = vsel %vm291, %v288, 0
        %v335 = vsel %vm291, %v289, 0
        %v338 = vsel %vm291, %v290, 0
        %340 = vmatprep.subr.mxu0 0.0
        %341 = vmatpush1.msra.mxu0 %v248
        %342 = vmatprep.subr.mxu0 0.0
        %343 = vmatpush1.msra.mxu0 %v249
        %344 = vmatprep.subr.mxu0 0.0
        %345 = vmatpush1.msra.mxu0 %v250
        %346 = vmatprep.subr.mxu0 0.0
        %347 = vmatpush1.msra.mxu0 %v251
        %348 = vmatprep.subr.mxu0 0.0
        %349 = vmatpush1.msra.mxu0 0.0
        %350 = vmatprep.subr.mxu0 0.0
        %351 = vmatpush1.msra.mxu0 0.0
        %352 = vmatprep.subr.mxu0 0.0
        %353 = vmatpush1.msra.mxu0 0.0
        %354 = vmatprep.subr.mxu0 0.0
        %355 = vmatpush1.msra.mxu0 0.0
        %356 = vmatprep.subr.mxu0 0.0
        %357 = vmatpush1.msra.mxu0 0.0
        %358 = vmatprep.subr.mxu0 0.0
        %359 = vmatpush1.msra.mxu0 0.0
        %360 = vmatprep.subr.mxu0 0.0
        %361 = vmatpush1.msra.mxu0 0.0
        %362 = vmatprep.subr.mxu0 0.0
        %363 = vmatpush1.msra.mxu0 0.0
        %364 = vmatprep.subr.mxu0 0.0
        %365 = vmatpush1.msra.mxu0 0.0
        %366 = vmatprep.subr.mxu0 0.0
        %367 = vmatpush1.msra.mxu0 0.0
        %368 = vmatprep.subr.mxu0 0.0
        %369 = vmatpush1.msra.mxu0 0.0
        %370 = vmatprep.subr.mxu0 0.0
        %371 = vmatpush1.msra.mxu0 0.0
        %372 = vmatprep.subr.mxu0 0.0
        %373 = vmatpush1.msra.mxu0 0.0
        %374 = vmatprep.subr.mxu0 0.0
        %375 = vmatpush1.msra.mxu0 0.0
        %376 = vmatprep.subr.mxu0 0.0
        %377 = vmatpush1.msra.mxu0 0.0
        %378 = vmatprep.subr.mxu0 0.0
        %379 = vmatpush1.msra.mxu0 0.0
        %380 = vmatprep.subr.mxu0 0.0
        %381 = vmatpush1.msra.mxu0 0.0
        %382 = vmatprep.subr.mxu0 0.0
        %383 = vmatpush1.msra.mxu0 0.0
        %384 = vmatprep.subr.mxu0 0.0
        %385 = vmatpush1.msra.mxu0 0.0
        %386 = vmatprep.subr.mxu0 0.0
        %387 = vmatpush1.msra.mxu0 0.0
        %388 = vmatprep.subr.mxu0 0.0
        %389 = vmatpush1.msra.mxu0 0.0
        %390 = vmatprep.subr.mxu0 0.0
        %391 = vmatpush1.msra.mxu0 0.0
        %392 = vmatprep.subr.mxu0 0.0
        %393 = vmatpush1.msra.mxu0 0.0
        %394 = vmatprep.subr.mxu0 0.0
        %395 = vmatpush1.msra.mxu0 0.0
        %396 = vmatprep.subr.mxu0 0.0
        %397 = vmatpush1.msra.mxu0 0.0
        %398 = vmatprep.subr.mxu0 0.0
        %399 = vmatpush1.msra.mxu0 0.0
        %400 = vmatprep.subr.mxu0 0.0
        %401 = vmatpush1.msra.mxu0 0.0
        %402 = vmatprep.subr.mxu0 0.0
        %403 = vmatpush1.msra.mxu0 0.0
        %404 = vmatprep.mubr.f32.mxu0 0.0
        %405 = vmatmul.mubr.f32.gmra.mrb[0].mxu0 %v293
        %v406 = vpop.f32.mrb[0].mxu0
        %v407 = vadd.f32 %v257, %v406
        %v408 = vpop.f32.mrb[0].mxu0
        %409 = vmatprep.mubr.f32.mxu0 0.0
        %410 = vmatmul.mubr.f32.gmra.mrb[0].mxu0 %v296
        %v411 = vpop.f32.mrb[0].mxu0
        %v412 = vadd.f32 %v257, %v411
        %v413 = vpop.f32.mrb[0].mxu0
        %414 = vmatprep.mubr.f32.mxu0 0.0
        %415 = vmatmul.mubr.f32.gmra.mrb[0].mxu0 %v299
        %v416 = vpop.f32.mrb[0].mxu0
        %v417 = vadd.f32 %v257, %v416
        %v418 = vpop.f32.mrb[0].mxu0
        %419 = vmatprep.mubr.f32.mxu0 0.0
        %420 = vmatmul.mubr.f32.gmra.mrb[0].mxu0 %v302
        %v421 = vpop.f32.mrb[0].mxu0
        %v422 = vadd.f32 %v257, %v421
        %v423 = vpop.f32.mrb[0].mxu0
        %424 = vmatprep.mubr.f32.mxu0 0.0
        %425 = vmatmul.mubr.f32.gmra.mrb[0].mxu0 %v305
        %v426 = vpop.f32.mrb[0].mxu0
        %v427 = vadd.f32 %v257, %v426
        %v428 = vpop.f32.mrb[0].mxu0
        %429 = vmatprep.mubr.f32.mxu0 0.0
        %430 = vmatmul.mubr.f32.gmra.mrb[0].mxu0 %v308
        %v431 = vpop.f32.mrb[0].mxu0
        %v432 = vadd.f32 %v257, %v431
        %v433 = vpop.f32.mrb[0].mxu0
        %434 = vmatprep.mubr.f32.mxu0 0.0
        %435 = vmatmul.mubr.f32.gmra.mrb[0].mxu0 %v311
        %v436 = vpop.f32.mrb[0].mxu0
        %v437 = vadd.f32 %v257, %v436
        %v438 = vpop.f32.mrb[0].mxu0
        %439 = vmatprep.mubr.f32.mxu0 0.0
        %440 = vmatmul.mubr.f32.gmra.mrb[0].mxu0 %v314
        %v441 = vpop.f32.mrb[0].mxu0
        %v442 = vadd.f32 %v257, %v441
        %v443 = vpop.f32.mrb[0].mxu0
        %444 = vmatprep.mubr.f32.mxu0 0.0
        %445 = vmatmul.mubr.f32.gmra.mrb[0].mxu0 %v317
        %v446 = vpop.f32.mrb[0].mxu0
        %v447 = vadd.f32 %v257, %v446
        %v448 = vpop.f32.mrb[0].mxu0
        %449 = vmatprep.mubr.f32.mxu0 0.0
        %450 = vmatmul.mubr.f32.gmra.mrb[0].mxu0 %v320
        %v451 = vpop.f32.mrb[0].mxu0
        %v452 = vadd.f32 %v257, %v451
        %v453 = vpop.f32.mrb[0].mxu0
        %454 = vmatprep.mubr.f32.mxu0 0.0
        %455 = vmatmul.mubr.f32.gmra.mrb[0].mxu0 %v323
        %v456 = vpop.f32.mrb[0].mxu0
        %v457 = vadd.f32 %v257, %v456
        %v458 = vpop.f32.mrb[0].mxu0
        %459 = vmatprep.mubr.f32.mxu0 0.0
        %460 = vmatmul.mubr.f32.gmra.mrb[0].mxu0 %v326
        %v461 = vpop.f32.mrb[0].mxu0
        %v462 = vadd.f32 %v257, %v461
        %v463 = vpop.f32.mrb[0].mxu0
        %464 = vmatprep.mubr.f32.mxu0 0.0
        %465 = vmatmul.mubr.f32.gmra.mrb[0].mxu0 %v329
        %v466 = vpop.f32.mrb[0].mxu0
        %v467 = vadd.f32 %v257, %v466
        %v468 = vpop.f32.mrb[0].mxu0
        %469 = vmatprep.mubr.f32.mxu0 0.0
        %470 = vmatmul.mubr.f32.gmra.mrb[0].mxu0 %v332
        %v471 = vpop.f32.mrb[0].mxu0
        %v472 = vadd.f32 %v257, %v471
        %v473 = vpop.f32.mrb[0].mxu0
        %474 = vmatprep.mubr.f32.mxu0 0.0
        %475 = vmatmul.mubr.f32.gmra.mrb[0].mxu0 %v335
        %v476 = vpop.f32.mrb[0].mxu0
        %v477 = vadd.f32 %v257, %v476
        %v478 = vpop.f32.mrb[0].mxu0
        %479 = vmatprep.mubr.f32.mxu0 0.0
        %480 = vmatmul.mubr.f32.gmra.mrb[0].mxu0 %v338
        %v481 = vpop.f32.mrb[0].mxu0
        %v482 = vadd.f32 %v257, %v481
        %v483 = vpop.f32.mrb[0].mxu0
        %484 = vdwg.mxu0
        %vm485 = vcmask 392192
        %486 = vst.msk [vmem:[%s242] sm:$0xff] %vm485, %v407
        %487 = vst.msk [vmem:[%s242 + $0x8] sm:$0xff] %vm485, %v412
        %488 = vst.msk [vmem:[%s242 + $0x10] sm:$0xff] %vm485, %v417
        %489 = vst.msk [vmem:[%s242 + $0x18] sm:$0xff] %vm485, %v422
        %490 = vst.msk [vmem:[%s242 + $0x20] sm:$0xff] %vm485, %v427
        %491 = vst.msk [vmem:[%s242 + $0x28] sm:$0xff] %vm485, %v432
        %492 = vst.msk [vmem:[%s242 + $0x30] sm:$0xff] %vm485, %v437
        %493 = vst.msk [vmem:[%s242 + $0x38] sm:$0xff] %vm485, %v442
        %494 = vst.msk [vmem:[%s242 + $0x40] sm:$0xff] %vm485, %v447
        %495 = vst.msk [vmem:[%s242 + $0x48] sm:$0xff] %vm485, %v452
        %496 = vst.msk [vmem:[%s242 + $0x50] sm:$0xff] %vm485, %v457
        %497 = vst.msk [vmem:[%s242 + $0x58] sm:$0xff] %vm485, %v462
        %498 = vst.msk [vmem:[%s242 + $0x60] sm:$0xff] %vm485, %v467
        %499 = vst.msk [vmem:[%s242 + $0x68] sm:$0xff] %vm485, %v472
        %500 = vst.msk [vmem:[%s242 + $0x70] sm:$0xff] %vm485, %v477
        %501 = vst.msk [vmem:[%s242 + $0x78] sm:$0xff] %vm485, %v482
        %s502 = smul.u32 16, %s19
        %p503 = scmp.lt.s32.totalorder %s18, 1
        %s504 = scalar_select %p503, %s18, 1
        %p505 = scmp.lt.s32.totalorder %s502, 31
        %s506 = scalar_select %p505, %s502, 31
        %s507 = smul.addr %s504, 32
        %s508 = sadd.s32 %s506, %s507
        %s509 = smul.addr %s508, 8
        %s510 = scalar_lea.vmem %s3, %s509
        // Predicated region
        $region71: #{_forward_all.1} parent=65 // pred_check
          %p511 = pneg %p116
        $region72: #{_forward_all.1} parent=65 // pred_check_branch
          %513 = sbr.rel (%p511) target = $region74
        $region73: #{_forward_all.1} parent=65 // pred_region
          %s514 = smul.u32 16, %s19
        $region74: #{_forward_all.1} parent=65 // pred_fallthru
          _
      $region66: #{_forward_all.1} parent=5 // pred_fallthru
        _
      %p515 = scmp.le.s32.totalorder 2, %s9
      // Predicated region
      $region75: #{_forward_all.1} parent=5 // pred_check
        %p516 = pneg %p515
      $region76: #{_forward_all.1} parent=5 // pred_check_branch
        %518 = sbr.rel (%p516) target = $region78
      $region77: #{_forward_all.1} parent=5 // pred_region
        %s519 = ssub.s32 %s9, 2
        // Predicated region
        $region79: #{_forward_all.1} parent=77 // pred_check
          %p520 = pneg %p122
        $region80: #{_forward_all.1} parent=77 // pred_check_branch
          %522 = sbr.rel (%p520) target = $region82
        $region81: #{_forward_all.1} parent=77 // pred_region
          %s523 = smul.u32 16, %s21
          %p524 = scmp.lt.s32.totalorder %s20, 1
          %s525 = scalar_select %p524, %s20, 1
          %p526 = scmp.lt.s32.totalorder %s523, 31
          %s527 = scalar_select %p526, %s523, 31
          %s528 = smul.addr %s525, 32
          %s529 = sadd.s32 %s527, %s528
          %s530 = smul.addr %s529, 8
          %s531 = scalar_lea.vmem %s3, %s530
        $region82: #{_forward_all.1} parent=77 // pred_fallthru
          _
      $region78: #{_forward_all.1} parent=5 // pred_fallthru
        _
    $region6: #{_forward_all.1} parent=1 // loop_footer
      %s13 = sadd.s32 1, %s9
    $region7: #{_forward_all.1} parent=1 // loop_footer_branch
      %8 = sbr.rel target = $region3
    $region8: #{_forward_all.1} parent=1 // loop_exit
      _

</llo_original>
